<compile_context>
chip_gen: v5e
topology: v5e:2x2
jax: 0.10.0
libtpu: 0.0.40
codegen_flags: <defaults>
</compile_context>

<pallas_src>
import math

import jax
import jax.numpy as jnp
from jax.experimental import pallas as pl
from jax.experimental.pallas import tpu as pltpu


# ---------------------------------------------------------------------------
# Helpers
# ---------------------------------------------------------------------------
def _round_up(x, m):
    return ((x + m - 1) // m) * m


def _pick_tile(dim, prefs):
    """Largest preferred tile that evenly divides `dim`, else the full dim.

    The full-dim fallback is only hit for small dims (demo shapes); pallas_linear
    additionally pads large irregular row counts up to a 128-multiple instead.
    """
    for p in prefs:
        if dim % p == 0:
            return p
    return dim


def _vmem_limit_bytes():
    """Generation-aware scoped-VMEM budget: ~3/4 of physical, capped at 96 MiB.
    v5e/v6e (128 MiB physical) -> 96 MiB; v7x (64 MiB physical) -> 48 MiB."""
    cap = 128 * 1024 * 1024
    try:
        cap = int(getattr(pltpu.get_tpu_info(), "vmem_capacity_bytes", cap))
    except Exception:
        pass
    return int(min(96 * 1024 * 1024, (cap * 3) // 4))


# ---------------------------------------------------------------------------
# Tiled linear kernel: y = x @ W + b   (bf16 operands, f32 accumulation)
# ---------------------------------------------------------------------------
def _linear_kernel(x_ref, w_ref, b_ref, o_ref, acc_ref):
    k = pl.program_id(2)

    @pl.when(k == 0)
    def _():
        acc_ref[...] = jnp.zeros_like(acc_ref)

    # bf16 x bf16 on the MXU with f32 accumulation — no upcast before the dot.
    acc_ref[...] += jnp.dot(x_ref[...], w_ref[...],
                            preferred_element_type=jnp.float32)

    @pl.when(k == pl.num_programs(2) - 1)
    def _():
        o_ref[...] = (acc_ref[...] + b_ref[...]).astype(o_ref.dtype)


def pallas_linear(x2d, w, b, out_dtype=jnp.float32):
    """y = x2d @ w + b with a real (M, N, K) grid and f32 VMEM accumulator.
    x2d / w are expected in bfloat16; bias is added in f32."""
    M, K = x2d.shape
    N = w.shape[1]

    tm = _pick_tile(M, (512, 256, 128))
    # Irregular large row counts (M = B*S) get zero-padded to a 128-multiple instead of
    # using one full-extent block (which could blow the scoped-VMEM limit).
    M_pad = M
    if tm == M and M > 512:
        tm = 128
        M_pad = _round_up(M, tm)
    if M_pad != M:
        x2d = jnp.pad(x2d, ((0, M_pad - M), (0, 0)))

    tn = _pick_tile(N, (512, 256, 128))
    tk = _pick_tile(K, (512, 256, 128))
    grid = (M_pad // tm, N // tn, K // tk)

    y = pl.pallas_call(
        _linear_kernel,
        out_shape=jax.ShapeDtypeStruct((M_pad, N), out_dtype),
        grid=grid,
        in_specs=[
            pl.BlockSpec((tm, tk), lambda i, j, k: (i, k)),
            pl.BlockSpec((tk, tn), lambda i, j, k: (k, j)),
            pl.BlockSpec((1, tn), lambda i, j, k: (0, j)),
        ],
        out_specs=pl.BlockSpec((tm, tn), lambda i, j, k: (i, j)),
        scratch_shapes=[pltpu.VMEM((tm, tn), jnp.float32)],
        compiler_params=pltpu.CompilerParams(
            dimension_semantics=("parallel", "parallel", "arbitrary"),
            vmem_limit_bytes=_vmem_limit_bytes()),
    )(x2d, w, b.reshape(1, N).astype(jnp.float32))
    return y[:M] if M_pad != M else y


# ---------------------------------------------------------------------------
# Flash-style GQA attention kernel (online softmax), grid (B, G, q_tiles, kv_tiles).
# All rep = H//G heads of a group share each streamed K/V tile.  Output is stored as
# (B, H, D, S) == the module's transpose(-1, -2).
# ---------------------------------------------------------------------------
def _make_flash_kernel(with_mask, mask_per_head):
    def kernel(*refs):
        if with_mask:
            q_ref, k_ref, v_ref, mask_ref, o_ref, m_sc, l_sc, acc_sc = refs
        else:
            q_ref, k_ref, v_ref, o_ref, m_sc, l_sc, acc_sc = refs
            mask_ref = None

        _, rep, tq, D = q_ref.shape
        ki = pl.program_id(3)

        @pl.when(ki == 0)
        def _():
            m_sc[...] = jnp.full_like(m_sc, -jnp.inf)
            l_sc[...] = jnp.zeros_like(l_sc)
            acc_sc[...] = jnp.zeros_like(acc_sc)

        # All rep query heads of this KV group fold into the matmul M dimension.
        # Operands stay bf16 (scale already folded into the Q projection weights).
        q = q_ref[0].reshape(rep * tq, D)            # (rep*tq, D) bf16
        k = k_ref[0, 0]                              # (tkv, D)    bf16
        v = v_ref[0, 0]                              # (tkv, D)    bf16

        # q @ k^T without materializing k.T: contract the last dims on the MXU (f32 out).
        s = jax.lax.dot_general(q, k, (((1,), (1,)), ((), ())),
                                preferred_element_type=jnp.float32)  # (rep*tq, tkv)

        if with_mask:
            # mask was pre-scaled by -1e9 on the host and stored as bf16
            if mask_per_head:
                m = mask_ref[0].astype(jnp.float32).reshape(rep * tq, -1)
            else:
                m0 = mask_ref[0, 0].astype(jnp.float32)              # (tq, tkv)
                m = jnp.broadcast_to(m0[None], (rep, tq, m0.shape[-1])
                                     ).reshape(rep * tq, -1)
            s = s + m

        # Softmax statistics stay in f32 (v5e's VPU/EUP have no bf16 path).
        m_prev = m_sc[...]
        m_new = jnp.maximum(m_prev, jnp.max(s, axis=-1, keepdims=True))
        alpha = jnp.exp(m_prev - m_new)
        p = jnp.exp(s - m_new)
        l_sc[...] = alpha * l_sc[...] + jnp.sum(p, axis=-1, keepdims=True)
        acc_sc[...] = alpha * acc_sc[...] + jnp.dot(
            p.astype(v.dtype), v, preferred_element_type=jnp.float32)   # bf16 P on MXU
        m_sc[...] = m_new

        @pl.when(ki == pl.num_programs(3) - 1)
        def _():
            out = acc_sc[...] * pl.reciprocal(l_sc[...], approx=True)   # EUP reciprocal
            # Store transposed per head: (rep, D, tq) == module's output.transpose(-1,-2),
            # lane-dense along the sequence axis at realistic tile sizes.
            out = jnp.swapaxes(out.reshape(rep, tq, D), -1, -2)
            o_ref[0] = out.astype(o_ref.dtype)

    return kernel


def pallas_gqa_attention(q, kg, vg, mask_scaled):
    """q: (B, H, S, D) bf16; kg/vg: (B, G, S, D) bf16 (NOT repeated); mask_scaled: None
    or (1|B, 1|H, S, S) bf16 already multiplied by -1e9.  Returns (B, H, D, S) bf16."""
    B, H, S, D = q.shape
    G = kg.shape[1]
    rep = H // G

    # Prefer large q tiles: K/V HBM re-reads scale with the number of q tiles.
    tq = _pick_tile(S, (512, 256, 128))
    tkv = _pick_tile(S, (512, 256, 128))
    nq, nkv = S // tq, S // tkv

    q_spec = pl.BlockSpec((1, rep, tq, D), lambda b, g, qi, ki: (b, g, qi, 0))
    kv_spec = pl.BlockSpec((1, 1, tkv, D), lambda b, g, qi, ki: (b, g, ki, 0))
    o_spec = pl.BlockSpec((1, rep, D, tq), lambda b, g, qi, ki: (b, g, 0, qi))
    scratch = [
        pltpu.VMEM((rep * tq, 1), jnp.float32),   # running max
        pltpu.VMEM((rep * tq, 1), jnp.float32),   # running denom
        pltpu.VMEM((rep * tq, D), jnp.float32),   # running accumulator
    ]
    cparams = pltpu.CompilerParams(
        dimension_semantics=("parallel", "parallel", "parallel", "arbitrary"),
        vmem_limit_bytes=_vmem_limit_bytes())

    if mask_scaled is None:
        kernel = _make_flash_kernel(with_mask=False, mask_per_head=False)
        in_specs = [q_spec, kv_spec, kv_spec]
        args = (q, kg, vg)
    else:
        Bm, Hm = mask_scaled.shape[0], mask_scaled.shape[1]
        mask_per_head = Hm > 1
        if mask_per_head:
            mask_spec = pl.BlockSpec(
                (1, rep, tq, tkv),
                lambda b, g, qi, ki: (b if Bm > 1 else 0, g, qi, ki))
        else:
            mask_spec = pl.BlockSpec(
                (1, 1, tq, tkv),
                lambda b, g, qi, ki: (b if Bm > 1 else 0, 0, qi, ki))
        kernel = _make_flash_kernel(with_mask=True, mask_per_head=mask_per_head)
        in_specs = [q_spec, kv_spec, kv_spec, mask_spec]
        args = (q, kg, vg, mask_scaled)

    return pl.pallas_call(
        kernel,
        out_shape=jax.ShapeDtypeStruct((B, H, D, S), jnp.bfloat16),
        grid=(B, G, nq, nkv),
        in_specs=in_specs,
        out_specs=o_spec,
        scratch_shapes=scratch,
        compiler_params=cparams,
    )(*args)


# ---------------------------------------------------------------------------
# Module wrapper (parameter setup + glue in plain JAX)
# ---------------------------------------------------------------------------
class GroupQueryAttentionPallas:
    def __init__(self, hidden_size, num_heads, group_num, key):
        assert hidden_size % num_heads == 0
        assert num_heads % group_num == 0
        self.hidden_size = hidden_size
        self.num_heads = num_heads
        self.head_dim = hidden_size // num_heads
        self.group_num = group_num

        def linear_params(k, fan_in, fan_out):
            # deterministic init mimicking nn.Linear (uniform +/- 1/sqrt(fan_in));
            # weight stored as (in, out) so forward is x @ W + b.
            kw, kb = jax.random.split(k)
            bound = 1.0 / math.sqrt(fan_in)
            w = jax.random.uniform(kw, (fan_in, fan_out), jnp.float32, -bound, bound)
            b = jax.random.uniform(kb, (fan_out,), jnp.float32, -bound, bound)
            return w, b

        kq, kk, kv, ko = jax.random.split(key, 4)
        kv_dim = group_num * self.head_dim
        wq, bq = linear_params(kq, hidden_size, hidden_size)
        wk, bk = linear_params(kk, hidden_size, kv_dim)
        wv, bv = linear_params(kv, hidden_size, kv_dim)
        wo, bo = linear_params(ko, hidden_size, hidden_size)

        # f32 master copies (used by the pure-JAX reference; scale NOT folded).
        self.w_qkv_f32 = jnp.concatenate([wq, wk, wv], axis=1)
        self.b_qkv_f32 = jnp.concatenate([bq, bk, bv], axis=0)
        self.wo_f32, self.bo_f32 = wo, bo

        # Kernel parameters: fused QKV projection (x read from HBM once), with the
        # 1/sqrt(head_dim) scale folded into the Q columns; weights in bf16 (native
        # MXU dtype), biases kept f32 (added to the f32 accumulator).
        scale = 1.0 / math.sqrt(self.head_dim)
        self.w_qkv = jnp.concatenate([wq * scale, wk, wv], axis=1).astype(jnp.bfloat16)
        self.b_qkv = jnp.concatenate([bq * scale, bk, bv], axis=0)      # f32
        self.wo = wo.astype(jnp.bfloat16)
        self.bo = bo                                                    # f32

    def __call__(self, hidden_state, attention_mask=None):
        B, S, Hs = hidden_state.shape
        H, G, D = self.num_heads, self.group_num, self.head_dim
        x2d = hidden_state.reshape(B * S, Hs).astype(jnp.bfloat16)

        # fused Q/K/V projection (single tiled bf16 Pallas matmul), bf16 output
        qkv = pallas_linear(x2d, self.w_qkv, self.b_qkv, out_dtype=jnp.bfloat16)
        kvd = G * D

        # split_head; K/V stay at (B, G, S, D) — no jnp.repeat (index_map folds heads).
        # These reshapes/transposes are plain XLA copies on bf16 tensors (kept host-side).
        q = qkv[:, :Hs].reshape(B, S, H, D).transpose(0, 2, 1, 3)        # (B, H, S, D)
        kg = qkv[:, Hs:Hs + kvd].reshape(B, S, G, D).transpose(0, 2, 1, 3)   # (B, G, S, D)
        vg = qkv[:, Hs + kvd:].reshape(B, S, G, D).transpose(0, 2, 1, 3)     # (B, G, S, D)

        mask_scaled = None
        if attention_mask is not None:
            m = jnp.asarray(attention_mask, jnp.float32)
            while m.ndim < 4:                                   # right-aligned broadcast,
                m = m[None]                                     # same as torch semantics
            # only the (query, key) dims are materialized to (S, S); batch / head
            # broadcast dims stay size-1 (handled by the index_map); -1e9 folded on the
            # host and the mask streamed as bf16 to halve its DMA cost.
            m = jnp.broadcast_to(m, m.shape[:2] + (S, S))
            mask_scaled = (m * jnp.float32(-1e9)).astype(jnp.bfloat16)

        attn_t = pallas_gqa_attention(q, kg, vg, mask_scaled)   # (B, H, D, S) bf16

        # PyTorch: output.transpose(-1, -2).contiguous().view(B, -1, D*H)
        # attn_t is already the transposed (B, H, D, S) tensor, so a reshape suffices.
        merged = attn_t.reshape(B, -1, D * H)                   # (B, S, hidden) bf16

        out2d = pallas_linear(merged.reshape(-1, D * H), self.wo, self.bo,
                              out_dtype=jnp.float32)
        return out2d.reshape(B, -1, Hs)


# ---------------------------------------------------------------------------
# Pure-JAX f32 reference of the PyTorch module (for a sanity check)
# ---------------------------------------------------------------------------
def _reference(module, x, mask=None):
    Hs, H, G, D = module.hidden_size, module.num_heads, module.group_num, module.head_dim
    B, S, _ = x.shape
    qkv = x.reshape(-1, Hs).astype(jnp.float32) @ module.w_qkv_f32 + module.b_qkv_f32
    q = qkv[:, :Hs].reshape(B, S, H, D).transpose(0, 2, 1, 3)
    k = qkv[:, Hs:Hs + G * D].reshape(B, S, G, D).transpose(0, 2, 1, 3)
    v = qkv[:, Hs + G * D:].reshape(B, S, G, D).transpose(0, 2, 1, 3)
    k = jnp.repeat(k, H // G, axis=1)
    v = jnp.repeat(v, H // G, axis=1)
    s = jnp.einsum('bhqd,bhkd->bhqk', q, k) / math.sqrt(D)
    if mask is not None:
        m = jnp.asarray(mask, jnp.float32)
        while m.ndim < 4:
            m = m[None]
        s = s + m * (-1e9)
    p = jax.nn.softmax(s, axis=-1)
    o = jnp.einsum('bhqk,bhkd->bhqd', p, v)
    o = jnp.swapaxes(o, -1, -2).reshape(B, -1, D * H)
    return (o.reshape(-1, D * H) @ module.wo_f32 + module.bo_f32).reshape(B, -1, Hs)


# ---------------------------------------------------------------------------
if __name__ == "__main__":
    # small shapes consistent with the module
    batch, seq, hidden, num_heads, group_num = 2, 8, 32, 4, 2

    root = jax.random.PRNGKey(0)
    k_params, k_input = jax.random.split(root)

    module = GroupQueryAttentionPallas(hidden, num_heads, group_num, k_params)
    hidden_state = jax.random.normal(k_input, (batch, seq, hidden), jnp.float32)

    # attention_mask=None path (module default) — mask-free kernel variant
    out = module(hidden_state)
    jax.block_until_ready(out)
    assert out.shape == (batch, seq, hidden)
    assert bool(jnp.all(jnp.isfinite(out)))
    ref = _reference(module, hidden_state)
    assert bool(jnp.allclose(out, ref, rtol=5e-2, atol=5e-2))

    # masked path — un-broadcast (1, 1, S, S) mask, added as mask * -1e9
    causal = jnp.triu(jnp.ones((seq, seq), jnp.float32), k=1)[None, None]
    out_m = module(hidden_state, attention_mask=causal)
    jax.block_until_ready(out_m)
    assert out_m.shape == (batch, seq, hidden)
    assert bool(jnp.all(jnp.isfinite(out_m)))
    ref_m = _reference(module, hidden_state, causal)
    assert bool(jnp.allclose(out_m, ref_m, rtol=5e-2, atol=5e-2))

    print("KERNEL_OK")
</pallas_src>

<mosaic_0001>
module attributes {stable_mosaic.version = 11 : i64} {
  func.func @_linear_kernel(%arg0: i32, %arg1: i32, %arg2: i32, %arg3: memref<16x32xbf16, #tpu.memory_space<vmem>>, %arg4: memref<32x64xbf16, #tpu.memory_space<vmem>>, %arg5: memref<1x64xf32, #tpu.memory_space<vmem>>, %arg6: memref<16x64xbf16, #tpu.memory_space<vmem>>, %arg7: memref<16x64xf32, #tpu.memory_space<vmem>>) attributes {dimension_semantics = [#tpu.dimension_semantics<parallel>, #tpu.dimension_semantics<parallel>, #tpu.dimension_semantics<arbitrary>], iteration_bounds = array<i64: 1, 1, 1>, scalar_prefetch = 0 : i64, scratch_operands = 1 : i64, tpu.core_type = #tpu.core_type<tc>, window_params = [{transform_indices = @transform_0, window_bounds = array<i64: 16, 32>}, {transform_indices = @transform_1, window_bounds = array<i64: 32, 64>}, {transform_indices = @transform_2, window_bounds = array<i64: 1, 64>}, {transform_indices = @transform_3, window_bounds = array<i64: 16, 64>}]} {
    %c0_i32 = arith.constant 0 : i32
    %0 = arith.cmpi eq, %arg2, %c0_i32 : i32
    %1 = arith.extui %0 : i1 to i32
    %c0_i32_0 = arith.constant 0 : i32
    %2 = arith.cmpi ne, %1, %c0_i32_0 : i32
    scf.if %2 {
      %cst_10 = arith.constant 0.000000e+00 : f32
      %12 = vector.broadcast %cst_10 : f32 to vector<16x64xf32>
      %c0_11 = arith.constant 0 : index
      %c0_12 = arith.constant 0 : index
      %13 = vector.load %arg7[%c0_11, %c0_12] : memref<16x64xf32, #tpu.memory_space<vmem>>, vector<16x64xf32>
      tpu.vector_store %arg7[%c0_11, %c0_12], %12 {strides = array<i32>} : memref<16x64xf32, #tpu.memory_space<vmem>>, vector<16x64xf32>,
    } else {
    }
    %c0 = arith.constant 0 : index
    %c0_1 = arith.constant 0 : index
    %3 = vector.load %arg7[%c0, %c0_1] : memref<16x64xf32, #tpu.memory_space<vmem>>, vector<16x64xf32>
    %c0_2 = arith.constant 0 : index
    %c0_3 = arith.constant 0 : index
    %4 = vector.load %arg3[%c0_2, %c0_3] : memref<16x32xbf16, #tpu.memory_space<vmem>>, vector<16x32xbf16>
    %c0_4 = arith.constant 0 : index
    %c0_5 = arith.constant 0 : index
    %5 = vector.load %arg4[%c0_4, %c0_5] : memref<32x64xbf16, #tpu.memory_space<vmem>>, vector<32x64xbf16>
    %cst = arith.constant dense<0.000000e+00> : vector<16x64xf32>
    %6 = tpu.matmul %4, %5, %cst {dimension_numbers = #tpu.dot_dimension_numbers<[1], [0], [0], [1], [0, 0, 1, 1], [], []>} : vector<16x32xbf16>, vector<32x64xbf16>, vector<16x64xf32> -> vector<16x64xf32>
    %7 = arith.addf %3, %6 : vector<16x64xf32>
    %c0_6 = arith.constant 0 : index
    %c0_7 = arith.constant 0 : index
    %8 = vector.load %arg7[%c0_6, %c0_7] : memref<16x64xf32, #tpu.memory_space<vmem>>, vector<16x64xf32>
    tpu.vector_store %arg7[%c0_6, %c0_7], %7 {strides = array<i32>} : memref<16x64xf32, #tpu.memory_space<vmem>>, vector<16x64xf32>,
    %c0_i32_8 = arith.constant 0 : i32
    %9 = arith.cmpi eq, %arg2, %c0_i32_8 : i32
    %10 = arith.extui %9 : i1 to i32
    %c0_i32_9 = arith.constant 0 : i32
    %11 = arith.cmpi ne, %10, %c0_i32_9 : i32
    scf.if %11 {
      %c0_10 = arith.constant 0 : index
      %c0_11 = arith.constant 0 : index
      %12 = vector.load %arg7[%c0_10, %c0_11] : memref<16x64xf32, #tpu.memory_space<vmem>>, vector<16x64xf32>
      %c0_12 = arith.constant 0 : index
      %c0_13 = arith.constant 0 : index
      %13 = vector.load %arg5[%c0_12, %c0_13] : memref<1x64xf32, #tpu.memory_space<vmem>>, vector<1x64xf32>
      %14 = vector.broadcast %13 : vector<1x64xf32> to vector<16x64xf32>
      %15 = arith.addf %12, %14 : vector<16x64xf32>
      %16 = arith.truncf %15 : vector<16x64xf32> to vector<16x64xbf16>
      %c0_14 = arith.constant 0 : index
      %c0_15 = arith.constant 0 : index
      %17 = vector.load %arg6[%c0_14, %c0_15] : memref<16x64xbf16, #tpu.memory_space<vmem>>, vector<16x64xbf16>
      tpu.vector_store %arg6[%c0_14, %c0_15], %16 {strides = array<i32>} : memref<16x64xbf16, #tpu.memory_space<vmem>>, vector<16x64xbf16>,
    } else {
    }
    return
  }
  func.func @transform_0(%arg0: i32, %arg1: i32, %arg2: i32) -> (i32, i32) {
    %c0_i32 = arith.constant 0 : i32
    return %arg0, %arg2 : i32, i32
  }
  func.func @transform_1(%arg0: i32, %arg1: i32, %arg2: i32) -> (i32, i32) {
    %c0_i32 = arith.constant 0 : i32
    return %arg2, %arg1 : i32, i32
  }
  func.func @transform_2(%arg0: i32, %arg1: i32, %arg2: i32) -> (i32, i32) {
    %c0_i32 = arith.constant 0 : i32
    %c0_i32_0 = arith.constant 0 : i32
    return %c0_i32, %arg1 : i32, i32
  }
  func.func @transform_3(%arg0: i32, %arg1: i32, %arg2: i32) -> (i32, i32) {
    %c0_i32 = arith.constant 0 : i32
    return %arg0, %arg1 : i32, i32
  }
}

</mosaic_0001>

<llo_original>
// kernel: tpu_custom_call.1
$region0: #{tpu_custom_call.1}
  #allocation0 [shape = 'u32[]', space=smem, size = 0x4, offset = 0x4, fixed_abs, tag = 'smem constant byte address 0x4 - core index']
  #allocation1 [shape = 'u32[72,128]{1,0:T(1,128)}', space=vmem, size = 0x9000, scoped, tag = 'internal scratch']
  #allocation2 [shape = 'f32[16,64]{1,0:T(8,128)}', space=vmem, size = 0x2000, scoped, tag = 'scratch operand']
  %s0 = inlined_call_operand.hbm [shape: bf16[16,32], index: 0, kind: input, shape index: {}]
  %s1 = inlined_call_operand.hbm [shape: bf16[32,64], index: 1, kind: input, shape index: {}]
  %s2 = inlined_call_operand.vmem [shape: f32[1,64], index: 2, kind: input, shape index: {}]
  %s3 = inlined_call_operand.hbm [shape: bf16[16,64], index: 3, kind: output, shape index: {}]
  %s4 = sld [smem:[#allocation0]]
  $region38: #{tpu_custom_call.1} parent=0
    _
  %s6 = ssub.s32 1, %s4
  %s7 = scalar_select 0, %s6, %s4
  $region1: #{tpu_custom_call.1} parent=0
    #allocation3 [shape = 'u8[4096]{0}', space=vmem, size = 0x1000, scoped, tag = 'input window, operand 0, single buffered']
    #allocation4 [shape = 's32[1]{0}', space=sflag, size = 0x4, scoped, tag = 'scoped memory for tpu_custom_call.1']
    #allocation5 [shape = 's32[1]{0}', space=sflag, size = 0x4, scoped, tag = 'scoped memory for tpu_custom_call.1']
    #allocation6 [shape = 'u8[8192]{0}', space=vmem, size = 0x2000, scoped, tag = 'input window, operand 1, single buffered']
    #allocation7 [shape = 's32[1]{0}', space=sflag, size = 0x4, scoped, tag = 'scoped memory for tpu_custom_call.1']
    #allocation8 [shape = 'u8[4096]{0}', space=vmem, size = 0x1000, scoped, tag = 'output window, operand 0, single buffered']
    %8 = vsyncpa [#allocation4], 0
    %9 = vsyncpa [#allocation7], 0
    %10 = vsyncpa [#allocation5], 0
    // Predicated region
    $region2: #{tpu_custom_call.1} parent=1 // pred_check
      _
    $region3: #{tpu_custom_call.1} parent=1 // pred_check_branch
      %12 = sbr.rel (0) target = $region5
    $region4: #{tpu_custom_call.1} parent=1 // pred_region
      %14 = vsyncadd [#allocation4], 0
      %s15 = sshll.u32 %s0, 4
      %s16 = int_to_ptr.hbm [resolvable:$true] %s15
      %s17 = sshll.u32 [#allocation3], 4
      %s18 = int_to_ptr.vmem [resolvable:$true] %s17
      %23 = dma.hbm_to_vmem [thread:$0]  %s16, 128, %s18, [#allocation4], 64, 64, 4
    $region5: #{tpu_custom_call.1} parent=1 // pred_fallthru
      _
    // Predicated region
    $region6: #{tpu_custom_call.1} parent=1 // pred_check
      _
    $region7: #{tpu_custom_call.1} parent=1 // pred_check_branch
      %25 = sbr.rel (0) target = $region9
    $region8: #{tpu_custom_call.1} parent=1 // pred_region
      %27 = vsyncadd [#allocation7], 0
      %s28 = sshll.u32 %s1, 4
      %s29 = int_to_ptr.hbm [resolvable:$true] %s28
      %s30 = sshll.u32 [#allocation6], 4
      %s31 = int_to_ptr.vmem [resolvable:$true] %s30
      %36 = dma.hbm_to_vmem [thread:$0]  %s29, 256, %s31, [#allocation7], 64, 64, 4
    $region9: #{tpu_custom_call.1} parent=1 // pred_fallthru
      _
    // Predicated region
    $region10: #{tpu_custom_call.1} parent=1 // pred_check
      _
    $region11: #{tpu_custom_call.1} parent=1 // pred_check_branch
      %38 = sbr.rel (0) target = $region13
    $region12: #{tpu_custom_call.1} parent=1 // pred_region
      _
    $region13: #{tpu_custom_call.1} parent=1 // pred_fallthru
      _
    // Predicated region
    $region14: #{tpu_custom_call.1} parent=1 // pred_check
      _
    $region15: #{tpu_custom_call.1} parent=1 // pred_check_branch
      %40 = sbr.rel (0) target = $region17
    $region16: #{tpu_custom_call.1} parent=1 // pred_region
      %42 = dma.done [#allocation4], 128
    $region17: #{tpu_custom_call.1} parent=1 // pred_fallthru
      _
    // Predicated region
    $region18: #{tpu_custom_call.1} parent=1 // pred_check
      _
    $region19: #{tpu_custom_call.1} parent=1 // pred_check_branch
      %44 = sbr.rel (0) target = $region21
    $region20: #{tpu_custom_call.1} parent=1 // pred_region
      %46 = dma.done [#allocation7], 256
    $region21: #{tpu_custom_call.1} parent=1 // pred_fallthru
      _
    %p48 = scmp.eq.s32.totalorder 0, 0
    // Predicated region
    $region22: #{tpu_custom_call.1} parent=1 // pred_check
      %p49 = pneg %p48
    $region23: #{tpu_custom_call.1} parent=1 // pred_check_branch
      %51 = sbr.rel (%p49) target = $region25
    $region24: #{tpu_custom_call.1} parent=1 // pred_region
      %vm52 = vcmask 523264
      %53 = vst.msk [vmem:[#allocation2] sm:$0xff] %vm52, 0.0
      %54 = vst.msk [vmem:[#allocation2 + $0x8] sm:$0xff] %vm52, 0.0
    $region25: #{tpu_custom_call.1} parent=1 // pred_fallthru
      _
    %v55 = vld [vmem:[#allocation2] sm:$0xff]
    %v56 = vld [vmem:[#allocation2 + $0x8] sm:$0xff]
    %v57 = vld [vmem:[#allocation3] sm:$0xf]
    %v58 = vld [vmem:[#allocation3 + $0x4] sm:$0xf]
    %v59 = vld [vmem:[#allocation6] sm:$0xf]
    %v60 = vld [vmem:[#allocation6 + $0x4] sm:$0xf]
    %v61 = vld [vmem:[#allocation6 + $0x8] sm:$0xf]
    %v62 = vld [vmem:[#allocation6 + $0xc] sm:$0xf]
    %v65 = vunpack.c.l.b16 %v57
    %v66 = vunpack.c.l.b16 %v58
    %v67 = vpack.c.b16 %v66, %v65
    %v72 = vunpack.c.l.b16 %v59
    %v73 = vunpack.c.l.b16 %v60
    %v74 = vunpack.c.l.b16 %v61
    %v75 = vunpack.c.l.b16 %v62
    %v76 = vpack.c.b16 %v73, %v72
    %v77 = vpack.c.b16 %v75, %v74
    %vm80 = vcmask 261120
    %v82 = vsel %vm80, %v67, 0
    %84 = vmatpush.bf16.msra.mxu0 0
    %85 = vmatpush.bf16.msra.mxu0 0
    %86 = vmatpush.bf16.msra.mxu0 0
    %87 = vmatpush.bf16.msra.mxu0 0
    %88 = vmatpush.bf16.msra.mxu0 0
    %89 = vmatpush.bf16.msra.mxu0 0
    %90 = vmatpush.bf16.msra.mxu0 %v77
    %91 = vmatpush.bf16.msra.mxu0 %v76
    %92 = vmatmul.bf16.gmra.mxu0 %v82
    %v93 = vpop.f32.mrf.mxu0
    %v94 = vadd.f32 0.0, %v93
    %v95 = vpop.f32.mrf.mxu0
    %v96 = vadd.f32 0.0, %v95
    %97 = vdwg.mxu0
    %v98 = vadd.f32 %v55, %v94
    %v99 = vadd.f32 %v56, %v96
    %vm100 = vcmask 523264
    %101 = vst.msk [vmem:[#allocation2] sm:$0xff] %vm100, %v98
    %102 = vst.msk [vmem:[#allocation2 + $0x8] sm:$0xff] %vm100, %v99
    // Predicated region
    $region26: #{tpu_custom_call.1} parent=1 // pred_check
      %p103 = pneg %p48
    $region27: #{tpu_custom_call.1} parent=1 // pred_check_branch
      %105 = sbr.rel (%p103) target = $region29
    $region28: #{tpu_custom_call.1} parent=1 // pred_region
      %v106 = vld [vmem:[#allocation2] sm:$0xff]
      %v107 = vld [vmem:[#allocation2 + $0x8] sm:$0xff]
      %v108 = vld [vmem:[%s2] sm:$0x1]
      %v110 = vperm.slane %v108, 0
      %v112 = vadd.f32 %v106, %v110
      %v113 = vadd.f32 %v107, %v110
      %v114 = vpack.c.bf16 %v112, %v112
      %v115 = vpack.c.bf16 %v113, %v113
      %vm116 = vcmask 519168
      %117 = vst.msk [vmem:[#allocation8] sm:$0xf] %vm116, %v114
      %118 = vst.msk [vmem:[#allocation8 + $0x4] sm:$0xf] %vm116, %v115
    $region29: #{tpu_custom_call.1} parent=1 // pred_fallthru
      _
    // Predicated region
    $region30: #{tpu_custom_call.1} parent=1 // pred_check
      _
    $region31: #{tpu_custom_call.1} parent=1 // pred_check_branch
      %120 = sbr.rel (0) target = $region33
    $region32: #{tpu_custom_call.1} parent=1 // pred_region
      %122 = vsyncadd [#allocation5], 0
      %s123 = sshll.u32 [#allocation8], 4
      %s124 = int_to_ptr.vmem [resolvable:$true] %s123
      %s125 = sshll.u32 %s3, 4
      %s126 = int_to_ptr.hbm [resolvable:$true] %s125
      %131 = dma.vmem_to_hbm [thread:$0]  %s124, 128, %s126, [#allocation5], 64, 64, 4
    $region33: #{tpu_custom_call.1} parent=1 // pred_fallthru
      _
    // Predicated region
    $region34: #{tpu_custom_call.1} parent=1 // pred_check
      _
    $region35: #{tpu_custom_call.1} parent=1 // pred_check_branch
      %133 = sbr.rel (0) target = $region37
    $region36: #{tpu_custom_call.1} parent=1 // pred_region
      %135 = dma.done [#allocation5], 128
    $region37: #{tpu_custom_call.1} parent=1 // pred_fallthru
      _
    %136 = vsyncpa [#allocation4], 1
    %137 = vsyncpa [#allocation7], 1
    %138 = vsyncpa [#allocation5], 1

</llo_original>
